<compile_context>
chip_gen: v7x
topology: tpu7x:2x2x1
jax: 0.10.0
libtpu: 0.0.40
codegen_flags: <defaults>
</compile_context>

<pallas_src>
import jax
import jax.numpy as jnp
from jax.experimental import pallas as pl
from jax.experimental.pallas import tpu as pltpu


LANE = 128  # lane-dense output width (padded fc3 out dim)


def qnetwork_kernel(x_ref, a_ref, w1x_ref, w1a_ref, b1_ref,
                    w2_ref, b2_ref, w3_ref, b3_ref, o_ref):
    # fc1 applied to the (virtual) concat [x, action]:
    #   cat([x,a]) @ W1 == x @ W1[:F] + a @ W1[F:]
    h1 = (jnp.dot(x_ref[...], w1x_ref[...], preferred_element_type=jnp.float32)
          + jnp.dot(a_ref[...], w1a_ref[...], preferred_element_type=jnp.float32)
          + b1_ref[...])
    h1 = jnp.maximum(h1, 0.0)                                    # ReLU

    # fc2: bf16 weights / activations on the MXU, f32 accumulation.
    h2 = jnp.dot(h1.astype(w2_ref.dtype), w2_ref[...],
                 preferred_element_type=jnp.float32) + b2_ref[...]
    h2 = jnp.maximum(h2, 0.0)                                    # ReLU

    # fc3: lane-dense padded output (only column 0 is meaningful).
    q = jnp.dot(h2, w3_ref[...], preferred_element_type=jnp.float32) + b3_ref[...]
    o_ref[...] = q.astype(o_ref.dtype)                           # [TB, 128]


def qnetwork_forward(x, action, params, *, batch_block=128):
    """x: [B, n_features], action: [B, n_actions] -> q: [B, 1]."""
    w1x, w1a, b1, w2, b2, w3p, b3p = params
    x = x.astype(jnp.float32)
    action = action.astype(jnp.float32)

    B, Fx = x.shape
    Fa = action.shape[1]
    H = w2.shape[0]
    OUTP = w3p.shape[1]

    TB = batch_block
    Bp = pl.cdiv(B, TB) * TB
    if Bp != B:  # pad ragged batch tail with zeros; sliced off below
        x = jnp.pad(x, ((0, Bp - B), (0, 0)))
        action = jnp.pad(action, ((0, Bp - B), (0, 0)))

    grid = (Bp // TB,)

    q_wide = pl.pallas_call(
        qnetwork_kernel,
        out_shape=jax.ShapeDtypeStruct((Bp, OUTP), jnp.float32),
        grid_spec=pltpu.PrefetchScalarGridSpec(
            num_scalar_prefetch=0,
            grid=grid,
            in_specs=[
                pl.BlockSpec((TB, Fx), lambda i: (i, 0)),    # x rows
                pl.BlockSpec((TB, Fa), lambda i: (i, 0)),    # action rows
                pl.BlockSpec((Fx, H), lambda i: (0, 0)),     # W1x (resident)
                pl.BlockSpec((Fa, H), lambda i: (0, 0)),     # W1a (resident)
                pl.BlockSpec((1, H), lambda i: (0, 0)),      # b1
                pl.BlockSpec((H, H), lambda i: (0, 0)),      # W2 (bf16, resident)
                pl.BlockSpec((1, H), lambda i: (0, 0)),      # b2
                pl.BlockSpec((H, OUTP), lambda i: (0, 0)),   # W3 (lane-padded)
                pl.BlockSpec((1, OUTP), lambda i: (0, 0)),   # b3 (lane-padded)
            ],
            out_specs=pl.BlockSpec((TB, OUTP), lambda i: (i, 0)),
        ),
        compiler_params=pltpu.CompilerParams(
            dimension_semantics=("parallel",),
        ),
    )(x, action, w1x, w1a, b1, w2, b2, w3p, b3p)

    return q_wide[:B, :1]


def init_qnetwork_params(key, n_features=3, n_actions=1, hidden_dim=256):
    """Deterministic init mimicking nn.Linear default: U(-1/sqrt(fan_in), 1/sqrt(fan_in)).

    Storage layout tuned for the kernel:
      W1 split into W1x [F,H] and W1a [A,H]; W2 stored bf16 [H,H];
      W3/b3 zero-padded to [H,128]/[1,128] for lane-dense output stores.
    """
    def linear(k, fan_in, fan_out):
        kw, kb = jax.random.split(k)
        bound = 1.0 / jnp.sqrt(jnp.float32(fan_in))
        w = jax.random.uniform(kw, (fan_in, fan_out), jnp.float32, -bound, bound)
        b = jax.random.uniform(kb, (1, fan_out), jnp.float32, -bound, bound)
        return w, b

    k1, k2, k3 = jax.random.split(key, 3)
    w1, b1 = linear(k1, n_features + n_actions, hidden_dim)
    w2, b2 = linear(k2, hidden_dim, hidden_dim)
    w3, b3 = linear(k3, hidden_dim, 1)

    w1x = w1[:n_features, :]
    w1a = w1[n_features:, :]
    w2_bf16 = w2.astype(jnp.bfloat16)
    w3p = jnp.zeros((hidden_dim, LANE), jnp.float32).at[:, :1].set(w3)
    b3p = jnp.zeros((1, LANE), jnp.float32).at[:, :1].set(b3)
    return (w1x, w1a, b1, w2_bf16, b2, w3p, b3p)


def qnetwork_reference(x, action, params):
    """Pure-JAX f32 reference (upcasts the stored bf16 W2)."""
    w1x, w1a, b1, w2, b2, w3p, b3p = params
    xa = jnp.concatenate([x, action], axis=-1)
    w1 = jnp.concatenate([w1x, w1a], axis=0)
    h1 = jnp.maximum(xa @ w1 + b1, 0.0)
    h2 = jnp.maximum(h1 @ w2.astype(jnp.float32) + b2, 0.0)
    return h2 @ w3p[:, :1] + b3p[:, :1]


if __name__ == "__main__":
    key = jax.random.PRNGKey(0)
    k_params, k_x, k_a = jax.random.split(key, 3)

    n_features, n_actions, hidden_dim = 3, 1, 256
    batch = 8

    params = init_qnetwork_params(k_params, n_features, n_actions, hidden_dim)
    x = jax.random.normal(k_x, (batch, n_features), jnp.float32)
    action = jax.random.normal(k_a, (batch, n_actions), jnp.float32)

    q = qnetwork_forward(x, action, params)
    q = jax.block_until_ready(q)

    q_ref = qnetwork_reference(x, action, params)
    assert q.shape == (batch, 1), q.shape
    # bf16 fc2 + MXU default precision -> relaxed (but tight enough) tolerance.
    assert jnp.allclose(q, q_ref, atol=2e-2, rtol=2e-2), (q, q_ref)

    print("KERNEL_OK")
</pallas_src>

<mosaic_0001>
module attributes {stable_mosaic.version = 11 : i64} {
  func.func @qnetwork_kernel(%arg0: i32, %arg1: memref<128x3xf32, #tpu.memory_space<vmem>>, %arg2: memref<128x1xf32, #tpu.memory_space<vmem>>, %arg3: memref<3x256xf32, #tpu.memory_space<vmem>>, %arg4: memref<1x256xf32, #tpu.memory_space<vmem>>, %arg5: memref<1x256xf32, #tpu.memory_space<vmem>>, %arg6: memref<256x256xbf16, #tpu.memory_space<vmem>>, %arg7: memref<1x256xf32, #tpu.memory_space<vmem>>, %arg8: memref<256x128xf32, #tpu.memory_space<vmem>>, %arg9: memref<1x128xf32, #tpu.memory_space<vmem>>, %arg10: memref<128x128xf32, #tpu.memory_space<vmem>>) attributes {dimension_semantics = [#tpu.dimension_semantics<parallel>], iteration_bounds = array<i64: 1>, scalar_prefetch = 0 : i64, scratch_operands = 0 : i64, tpu.core_type = #tpu.core_type<tc>, window_params = [{transform_indices = @transform_0, window_bounds = array<i64: 128, 3>}, {transform_indices = @transform_1, window_bounds = array<i64: 128, 1>}, {pipeline_mode = #tpu.pipeline_mode<synchronous>, transform_indices = @transform_2, window_bounds = array<i64: 3, 256>}, {pipeline_mode = #tpu.pipeline_mode<synchronous>, transform_indices = @transform_3, window_bounds = array<i64: 1, 256>}, {pipeline_mode = #tpu.pipeline_mode<synchronous>, transform_indices = @transform_4, window_bounds = array<i64: 1, 256>}, {pipeline_mode = #tpu.pipeline_mode<synchronous>, transform_indices = @transform_5, window_bounds = array<i64: 256, 256>}, {pipeline_mode = #tpu.pipeline_mode<synchronous>, transform_indices = @transform_6, window_bounds = array<i64: 1, 256>}, {pipeline_mode = #tpu.pipeline_mode<synchronous>, transform_indices = @transform_7, window_bounds = array<i64: 256, 128>}, {pipeline_mode = #tpu.pipeline_mode<synchronous>, transform_indices = @transform_8, window_bounds = array<i64: 1, 128>}, {transform_indices = @transform_9, window_bounds = array<i64: 128, 128>}]} {
    %c0 = arith.constant 0 : index
    %c0_0 = arith.constant 0 : index
    %0 = vector.load %arg1[%c0, %c0_0] : memref<128x3xf32, #tpu.memory_space<vmem>>, vector<128x3xf32>
    %c0_1 = arith.constant 0 : index
    %c0_2 = arith.constant 0 : index
    %1 = vector.load %arg3[%c0_1, %c0_2] : memref<3x256xf32, #tpu.memory_space<vmem>>, vector<3x256xf32>
    %cst = arith.constant dense<0.000000e+00> : vector<128x256xf32>
    %2 = tpu.matmul %0, %1, %cst {dimension_numbers = #tpu.dot_dimension_numbers<[1], [0], [0], [1], [0, 0, 1, 1], [], []>} : vector<128x3xf32>, vector<3x256xf32>, vector<128x256xf32> -> vector<128x256xf32>
    %c0_3 = arith.constant 0 : index
    %c0_4 = arith.constant 0 : index
    %3 = vector.load %arg2[%c0_3, %c0_4] : memref<128x1xf32, #tpu.memory_space<vmem>>, vector<128x1xf32>
    %c0_5 = arith.constant 0 : index
    %c0_6 = arith.constant 0 : index
    %4 = vector.load %arg4[%c0_5, %c0_6] : memref<1x256xf32, #tpu.memory_space<vmem>>, vector<1x256xf32>
    %cst_7 = arith.constant dense<0.000000e+00> : vector<128x256xf32>
    %5 = tpu.matmul %3, %4, %cst_7 {dimension_numbers = #tpu.dot_dimension_numbers<[1], [0], [0], [1], [0, 0, 1, 1], [], []>} : vector<128x1xf32>, vector<1x256xf32>, vector<128x256xf32> -> vector<128x256xf32>
    %6 = arith.addf %2, %5 : vector<128x256xf32>
    %c0_8 = arith.constant 0 : index
    %c0_9 = arith.constant 0 : index
    %7 = vector.load %arg5[%c0_8, %c0_9] : memref<1x256xf32, #tpu.memory_space<vmem>>, vector<1x256xf32>
    %8 = vector.broadcast %7 : vector<1x256xf32> to vector<128x256xf32>
    %9 = arith.addf %6, %8 : vector<128x256xf32>
    %cst_10 = arith.constant 0.000000e+00 : f32
    %10 = vector.broadcast %cst_10 : f32 to vector<128x256xf32>
    %11 = arith.maximumf %9, %10 : vector<128x256xf32>
    %12 = arith.truncf %11 : vector<128x256xf32> to vector<128x256xbf16>
    %c0_11 = arith.constant 0 : index
    %c0_12 = arith.constant 0 : index
    %13 = vector.load %arg6[%c0_11, %c0_12] : memref<256x256xbf16, #tpu.memory_space<vmem>>, vector<256x256xbf16>
    %cst_13 = arith.constant dense<0.000000e+00> : vector<128x256xf32>
    %14 = tpu.matmul %12, %13, %cst_13 {dimension_numbers = #tpu.dot_dimension_numbers<[1], [0], [0], [1], [0, 0, 1, 1], [], []>} : vector<128x256xbf16>, vector<256x256xbf16>, vector<128x256xf32> -> vector<128x256xf32>
    %c0_14 = arith.constant 0 : index
    %c0_15 = arith.constant 0 : index
    %15 = vector.load %arg7[%c0_14, %c0_15] : memref<1x256xf32, #tpu.memory_space<vmem>>, vector<1x256xf32>
    %16 = vector.broadcast %15 : vector<1x256xf32> to vector<128x256xf32>
    %17 = arith.addf %14, %16 : vector<128x256xf32>
    %cst_16 = arith.constant 0.000000e+00 : f32
    %18 = vector.broadcast %cst_16 : f32 to vector<128x256xf32>
    %19 = arith.maximumf %17, %18 : vector<128x256xf32>
    %c0_17 = arith.constant 0 : index
    %c0_18 = arith.constant 0 : index
    %20 = vector.load %arg8[%c0_17, %c0_18] : memref<256x128xf32, #tpu.memory_space<vmem>>, vector<256x128xf32>
    %cst_19 = arith.constant dense<0.000000e+00> : vector<128x128xf32>
    %21 = tpu.matmul %19, %20, %cst_19 {dimension_numbers = #tpu.dot_dimension_numbers<[1], [0], [0], [1], [0, 0, 1, 1], [], []>} : vector<128x256xf32>, vector<256x128xf32>, vector<128x128xf32> -> vector<128x128xf32>
    %c0_20 = arith.constant 0 : index
    %c0_21 = arith.constant 0 : index
    %22 = vector.load %arg9[%c0_20, %c0_21] : memref<1x128xf32, #tpu.memory_space<vmem>>, vector<1x128xf32>
    %23 = vector.broadcast %22 : vector<1x128xf32> to vector<128x128xf32>
    %24 = arith.addf %21, %23 : vector<128x128xf32>
    %c0_22 = arith.constant 0 : index
    %c0_23 = arith.constant 0 : index
    %25 = vector.load %arg10[%c0_22, %c0_23] : memref<128x128xf32, #tpu.memory_space<vmem>>, vector<128x128xf32>
    tpu.vector_store %arg10[%c0_22, %c0_23], %24 {strides = array<i32>} : memref<128x128xf32, #tpu.memory_space<vmem>>, vector<128x128xf32>,
    return
  }
  func.func @transform_0(%arg0: i32) -> (i32, i32) {
    %c0_i32 = arith.constant 0 : i32
    %c0_i32_0 = arith.constant 0 : i32
    return %arg0, %c0_i32 : i32, i32
  }
  func.func @transform_1(%arg0: i32) -> (i32, i32) {
    %c0_i32 = arith.constant 0 : i32
    %c0_i32_0 = arith.constant 0 : i32
    return %arg0, %c0_i32 : i32, i32
  }
  func.func @transform_2(%arg0: i32) -> (i32, i32) {
    %c0_i32 = arith.constant 0 : i32
    %c0_i32_0 = arith.constant 0 : i32
    %c0_i32_1 = arith.constant 0 : i32
    return %c0_i32, %c0_i32_0 : i32, i32
  }
  func.func @transform_3(%arg0: i32) -> (i32, i32) {
    %c0_i32 = arith.constant 0 : i32
    %c0_i32_0 = arith.constant 0 : i32
    %c0_i32_1 = arith.constant 0 : i32
    return %c0_i32, %c0_i32_0 : i32, i32
  }
  func.func @transform_4(%arg0: i32) -> (i32, i32) {
    %c0_i32 = arith.constant 0 : i32
    %c0_i32_0 = arith.constant 0 : i32
    %c0_i32_1 = arith.constant 0 : i32
    return %c0_i32, %c0_i32_0 : i32, i32
  }
  func.func @transform_5(%arg0: i32) -> (i32, i32) {
    %c0_i32 = arith.constant 0 : i32
    %c0_i32_0 = arith.constant 0 : i32
    %c0_i32_1 = arith.constant 0 : i32
    return %c0_i32, %c0_i32_0 : i32, i32
  }
  func.func @transform_6(%arg0: i32) -> (i32, i32) {
    %c0_i32 = arith.constant 0 : i32
    %c0_i32_0 = arith.constant 0 : i32
    %c0_i32_1 = arith.constant 0 : i32
    return %c0_i32, %c0_i32_0 : i32, i32
  }
  func.func @transform_7(%arg0: i32) -> (i32, i32) {
    %c0_i32 = arith.constant 0 : i32
    %c0_i32_0 = arith.constant 0 : i32
    %c0_i32_1 = arith.constant 0 : i32
    return %c0_i32, %c0_i32_0 : i32, i32
  }
  func.func @transform_8(%arg0: i32) -> (i32, i32) {
    %c0_i32 = arith.constant 0 : i32
    %c0_i32_0 = arith.constant 0 : i32
    %c0_i32_1 = arith.constant 0 : i32
    return %c0_i32, %c0_i32_0 : i32, i32
  }
  func.func @transform_9(%arg0: i32) -> (i32, i32) {
    %c0_i32 = arith.constant 0 : i32
    %c0_i32_0 = arith.constant 0 : i32
    return %arg0, %c0_i32 : i32, i32
  }
}

</mosaic_0001>

<llo_original>
// kernel: tpu_custom_call.1
$region0: #{tpu_custom_call.1}
  #allocation0 [shape = 'u32[]', space=smem, size = 0x4, offset = 0x4, fixed_abs, tag = 'smem constant byte address 0x4 - core index']
  #allocation1 [shape = 'u32[144,128]{1,0:T(1,128)}', space=vmem, size = 0x12000, scoped, tag = 'internal scratch']
  %s0 = inlined_call_operand.vmem [shape: f32[128,3], index: 0, kind: input, shape index: {}]
  %s1 = inlined_call_operand.vmem [shape: f32[128,1], index: 1, kind: input, shape index: {}]
  %s2 = inlined_call_operand.vmem [shape: f32[3,256], index: 2, kind: input, shape index: {}]
  %s3 = inlined_call_operand.vmem [shape: f32[1,256], index: 3, kind: input, shape index: {}]
  %s4 = inlined_call_operand.vmem [shape: f32[1,256], index: 4, kind: input, shape index: {}]
  %s5 = inlined_call_operand.vmem [shape: bf16[256,256], index: 5, kind: input, shape index: {}]
  %s6 = inlined_call_operand.vmem [shape: f32[1,256], index: 6, kind: input, shape index: {}]
  %s7 = inlined_call_operand.hbm [shape: f32[256,128], index: 7, kind: input, shape index: {}]
  %s8 = inlined_call_operand.vmem [shape: f32[1,128], index: 8, kind: input, shape index: {}]
  %s9 = inlined_call_operand.hbm [shape: f32[128,128], index: 9, kind: output, shape index: {}]
  %s10 = sld [smem:[#allocation0]]
  $region50: #{tpu_custom_call.1} parent=0
    _
  %s12 = ssub.s32 1, %s10
  %s13 = scalar_select 0, %s12, %s10
  $region1: #{tpu_custom_call.1} parent=0
    #allocation2 [shape = 'u8[131072]{0}', space=vmem, size = 0x20000, scoped, tag = 'input window, operand 7, single buffered']
    #allocation3 [shape = 's32[1]{0}', space=sflag, size = 0x4, scoped, tag = 'scoped memory for tpu_custom_call.1']
    #allocation4 [shape = 's32[1]{0}', space=sflag, size = 0x4, scoped, tag = 'scoped memory for tpu_custom_call.1']
    #allocation5 [shape = 'u8[65536]{0}', space=vmem, size = 0x10000, scoped, tag = 'output window, operand 0, single buffered']
    %14 = vsyncpa [#allocation3], 0
    %15 = vsyncpa [#allocation4], 0
    // Predicated region
    $region2: #{tpu_custom_call.1} parent=1 // pred_check
      _
    $region3: #{tpu_custom_call.1} parent=1 // pred_check_branch
      %17 = sbr.rel (0) target = $region5
    $region4: #{tpu_custom_call.1} parent=1 // pred_region
      _
    $region5: #{tpu_custom_call.1} parent=1 // pred_fallthru
      _
    // Predicated region
    $region6: #{tpu_custom_call.1} parent=1 // pred_check
      _
    $region7: #{tpu_custom_call.1} parent=1 // pred_check_branch
      %19 = sbr.rel (0) target = $region9
    $region8: #{tpu_custom_call.1} parent=1 // pred_region
      _
    $region9: #{tpu_custom_call.1} parent=1 // pred_fallthru
      _
    // Predicated region
    $region10: #{tpu_custom_call.1} parent=1 // pred_check
      _
    $region11: #{tpu_custom_call.1} parent=1 // pred_check_branch
      %21 = sbr.rel (0) target = $region13
    $region12: #{tpu_custom_call.1} parent=1 // pred_region
      _
    $region13: #{tpu_custom_call.1} parent=1 // pred_fallthru
      _
    // Predicated region
    $region14: #{tpu_custom_call.1} parent=1 // pred_check
      _
    $region15: #{tpu_custom_call.1} parent=1 // pred_check_branch
      %23 = sbr.rel (0) target = $region17
    $region16: #{tpu_custom_call.1} parent=1 // pred_region
      _
    $region17: #{tpu_custom_call.1} parent=1 // pred_fallthru
      _
    // Predicated region
    $region18: #{tpu_custom_call.1} parent=1 // pred_check
      _
    $region19: #{tpu_custom_call.1} parent=1 // pred_check_branch
      %25 = sbr.rel (0) target = $region21
    $region20: #{tpu_custom_call.1} parent=1 // pred_region
      _
    $region21: #{tpu_custom_call.1} parent=1 // pred_fallthru
      _
    // Predicated region
    $region22: #{tpu_custom_call.1} parent=1 // pred_check
      _
    $region23: #{tpu_custom_call.1} parent=1 // pred_check_branch
      %27 = sbr.rel (0) target = $region25
    $region24: #{tpu_custom_call.1} parent=1 // pred_region
      _
    $region25: #{tpu_custom_call.1} parent=1 // pred_fallthru
      _
    // Predicated region
    $region26: #{tpu_custom_call.1} parent=1 // pred_check
      _
    $region27: #{tpu_custom_call.1} parent=1 // pred_check_branch
      %29 = sbr.rel (0) target = $region29
    $region28: #{tpu_custom_call.1} parent=1 // pred_region
      _
    $region29: #{tpu_custom_call.1} parent=1 // pred_fallthru
      _
    // Predicated region
    $region30: #{tpu_custom_call.1} parent=1 // pred_check
      _
    $region31: #{tpu_custom_call.1} parent=1 // pred_check_branch
      %31 = sbr.rel (0) target = $region33
    $region32: #{tpu_custom_call.1} parent=1 // pred_region
      %s33 = ssub.s32 4096, 4096
      %34 = vsyncadd [#allocation3], %s33
      %s35 = sshll.u32 [#allocation2], 4
      %s36 = int_to_ptr.vmem [resolvable:$true] %s35
      %41 = dma.hbm_to_vmem [thread:$0]  %s7, 4096, %s36, [#allocation3], 128, 128, 8
    $region33: #{tpu_custom_call.1} parent=1 // pred_fallthru
      _
    // Predicated region
    $region34: #{tpu_custom_call.1} parent=1 // pred_check
      _
    $region35: #{tpu_custom_call.1} parent=1 // pred_check_branch
      %43 = sbr.rel (0) target = $region37
    $region36: #{tpu_custom_call.1} parent=1 // pred_region
      _
    $region37: #{tpu_custom_call.1} parent=1 // pred_fallthru
      _
    // Predicated region
    $region38: #{tpu_custom_call.1} parent=1 // pred_check
      _
    $region39: #{tpu_custom_call.1} parent=1 // pred_check_branch
      %45 = sbr.rel (0) target = $region41
    $region40: #{tpu_custom_call.1} parent=1 // pred_region
      %46 = dma.done [#allocation3], 4096
    $region41: #{tpu_custom_call.1} parent=1 // pred_fallthru
      _
    %v47 = vld [vmem:[%s0] sm:$0xff]
    %v48 = vld [vmem:[%s0 + $0x8] sm:$0xff]
    %v49 = vld [vmem:[%s0 + $0x10] sm:$0xff]
    %v50 = vld [vmem:[%s0 + $0x18] sm:$0xff]
    %v51 = vld [vmem:[%s0 + $0x20] sm:$0xff]
    %v52 = vld [vmem:[%s0 + $0x28] sm:$0xff]
    %v53 = vld [vmem:[%s0 + $0x30] sm:$0xff]
    %v54 = vld [vmem:[%s0 + $0x38] sm:$0xff]
    %v55 = vld [vmem:[%s0 + $0x40] sm:$0xff]
    %v56 = vld [vmem:[%s0 + $0x48] sm:$0xff]
    %v57 = vld [vmem:[%s0 + $0x50] sm:$0xff]
    %v58 = vld [vmem:[%s0 + $0x58] sm:$0xff]
    %v59 = vld [vmem:[%s0 + $0x60] sm:$0xff]
    %v60 = vld [vmem:[%s0 + $0x68] sm:$0xff]
    %v61 = vld [vmem:[%s0 + $0x70] sm:$0xff]
    %v62 = vld [vmem:[%s0 + $0x78] sm:$0xff]
    %v63 = vld [vmem:[%s2] sm:$0x77]
    %v64 = vld [vmem:[%s1] sm:$0xff]
    %v65 = vld [vmem:[%s1 + $0x8] sm:$0xff]
    %v66 = vld [vmem:[%s1 + $0x10] sm:$0xff]
    %v67 = vld [vmem:[%s1 + $0x18] sm:$0xff]
    %v68 = vld [vmem:[%s1 + $0x20] sm:$0xff]
    %v69 = vld [vmem:[%s1 + $0x28] sm:$0xff]
    %v70 = vld [vmem:[%s1 + $0x30] sm:$0xff]
    %v71 = vld [vmem:[%s1 + $0x38] sm:$0xff]
    %v72 = vld [vmem:[%s1 + $0x40] sm:$0xff]
    %v73 = vld [vmem:[%s1 + $0x48] sm:$0xff]
    %v74 = vld [vmem:[%s1 + $0x50] sm:$0xff]
    %v75 = vld [vmem:[%s1 + $0x58] sm:$0xff]
    %v76 = vld [vmem:[%s1 + $0x60] sm:$0xff]
    %v77 = vld [vmem:[%s1 + $0x68] sm:$0xff]
    %v78 = vld [vmem:[%s1 + $0x70] sm:$0xff]
    %v79 = vld [vmem:[%s1 + $0x78] sm:$0xff]
    %v80 = vld [vmem:[%s3] sm:$0x3]
    %v82 = vlaneseq
    %v83 = vshrl.u32 %v82, 7
    %v84 = vsub.s32 0, %v83
    %v85 = vrot.slane %v80, %v84
    %v86 = vlaneseq
    %v87 = vshrl.u32 %v86, 7
    %v88 = vsub.s32 1, %v87
    %v89 = vrot.slane %v80, %v88
    %vm90 = vcmask 7168
    %v92 = vsel %vm90, %v64, 0
    %v95 = vsel %vm90, %v65, 0
    %v98 = vsel %vm90, %v66, 0
    %v101 = vsel %vm90, %v67, 0
    %v104 = vsel %vm90, %v68, 0
    %v107 = vsel %vm90, %v69, 0
    %v110 = vsel %vm90, %v70, 0
    %v113 = vsel %vm90, %v71, 0
    %v116 = vsel %vm90, %v72, 0
    %v119 = vsel %vm90, %v73, 0
    %v122 = vsel %vm90, %v74, 0
    %v125 = vsel %vm90, %v75, 0
    %v128 = vsel %vm90, %v76, 0
    %v131 = vsel %vm90, %v77, 0
    %v134 = vsel %vm90, %v78, 0
    %v137 = vsel %vm90, %v79, 0
    %vm139 = vcmask 1040384
    %v140 = vsel %vm139, %v85, 0
    %v142 = vsel %vm139, %v89, 0
    %144 = vmatprep.subr.mxu0 %v142
    %145 = vmatpush1.msra.mxu0 %v140
    %146 = vmatprep.subr.mxu0 0.0
    %147 = vmatpush1.msra.mxu0 0.0
    %148 = vmatprep.subr.mxu0 0.0
    %149 = vmatpush1.msra.mxu0 0.0
    %150 = vmatprep.subr.mxu0 0.0
    %151 = vmatpush1.msra.mxu0 0.0
    %152 = vmatprep.subr.mxu0 0.0
    %153 = vmatpush1.msra.mxu0 0.0
    %154 = vmatprep.subr.mxu0 0.0
    %155 = vmatpush1.msra.mxu0 0.0
    %156 = vmatprep.subr.mxu0 0.0
    %157 = vmatpush1.msra.mxu0 0.0
    %158 = vmatprep.subr.mxu0 0.0
    %159 = vmatpush1.msra.mxu0 0.0
    %160 = vmatprep.subr.mxu0 0.0
    %161 = vmatpush1.msra.mxu0 0.0
    %162 = vmatprep.subr.mxu0 0.0
    %163 = vmatpush1.msra.mxu0 0.0
    %164 = vmatprep.subr.mxu0 0.0
    %165 = vmatpush1.msra.mxu0 0.0
    %166 = vmatprep.subr.mxu0 0.0
    %167 = vmatpush1.msra.mxu0 0.0
    %168 = vmatprep.subr.mxu0 0.0
    %169 = vmatpush1.msra.mxu0 0.0
    %170 = vmatprep.subr.mxu0 0.0
    %171 = vmatpush1.msra.mxu0 0.0
    %172 = vmatprep.subr.mxu0 0.0
    %173 = vmatpush1.msra.mxu0 0.0
    %174 = vmatprep.subr.mxu0 0.0
    %175 = vmatpush1.msra.mxu0 0.0
    %176 = vmatprep.subr.mxu0 0.0
    %177 = vmatpush1.msra.mxu0 0.0
    %178 = vmatprep.subr.mxu0 0.0
    %179 = vmatpush1.msra.mxu0 0.0
    %180 = vmatprep.subr.mxu0 0.0
    %181 = vmatpush1.msra.mxu0 0.0
    %182 = vmatprep.subr.mxu0 0.0
    %183 = vmatpush1.msra.mxu0 0.0
    %184 = vmatprep.subr.mxu0 0.0
    %185 = vmatpush1.msra.mxu0 0.0
    %186 = vmatprep.subr.mxu0 0.0
    %187 = vmatpush1.msra.mxu0 0.0
    %188 = vmatprep.subr.mxu0 0.0
    %189 = vmatpush1.msra.mxu0 0.0
    %190 = vmatprep.subr.mxu0 0.0
    %191 = vmatpush1.msra.mxu0 0.0
    %192 = vmatprep.subr.mxu0 0.0
    %193 = vmatpush1.msra.mxu0 0.0
    %194 = vmatprep.subr.mxu0 0.0
    %195 = vmatpush1.msra.mxu0 0.0
    %196 = vmatprep.subr.mxu0 0.0
    %197 = vmatpush1.msra.mxu0 0.0
    %198 = vmatprep.subr.mxu0 0.0
    %199 = vmatpush1.msra.mxu0 0.0
    %200 = vmatprep.subr.mxu0 0.0
    %201 = vmatpush1.msra.mxu0 0.0
    %202 = vmatprep.subr.mxu0 0.0
    %203 = vmatpush1.msra.mxu0 0.0
    %204 = vmatprep.subr.mxu0 0.0
    %205 = vmatpush1.msra.mxu0 0.0
    %206 = vmatprep.subr.mxu0 0.0
    %207 = vmatpush1.msra.mxu0 0.0
    %208 = vmatprep.mubr.f32.mxu0 0.0
    %209 = vmatmul.mubr.f32.gmra.mrb[0].mxu0 %v92
    %v210 = vpop.f32.mrb[0].mxu0
    %v211 = vadd.f32 0.0, %v210
    %v212 = vpop.f32.mrb[0].mxu0
    %v213 = vadd.f32 0.0, %v212
    %214 = vmatprep.mubr.f32.mxu0 0.0
    %215 = vmatmul.mubr.f32.gmra.mrb[0].mxu0 %v95
    %v216 = vpop.f32.mrb[0].mxu0
    %v217 = vadd.f32 0.0, %v216
    %v218 = vpop.f32.mrb[0].mxu0
    %v219 = vadd.f32 0.0, %v218
    %220 = vmatprep.mubr.f32.mxu0 0.0
    %221 = vmatmul.mubr.f32.gmra.mrb[0].mxu0 %v98
    %v222 = vpop.f32.mrb[0].mxu0
    %v223 = vadd.f32 0.0, %v222
    %v224 = vpop.f32.mrb[0].mxu0
    %v225 = vadd.f32 0.0, %v224
    %226 = vmatprep.mubr.f32.mxu0 0.0
    %227 = vmatmul.mubr.f32.gmra.mrb[0].mxu0 %v101
    %v228 = vpop.f32.mrb[0].mxu0
    %v229 = vadd.f32 0.0, %v228
    %v230 = vpop.f32.mrb[0].mxu0
    %v231 = vadd.f32 0.0, %v230
    %232 = vmatprep.mubr.f32.mxu0 0.0
    %233 = vmatmul.mubr.f32.gmra.mrb[0].mxu0 %v104
    %v234 = vpop.f32.mrb[0].mxu0
    %v235 = vadd.f32 0.0, %v234
    %v236 = vpop.f32.mrb[0].mxu0
    %v237 = vadd.f32 0.0, %v236
    %238 = vmatprep.mubr.f32.mxu0 0.0
    %239 = vmatmul.mubr.f32.gmra.mrb[0].mxu0 %v107
    %v240 = vpop.f32.mrb[0].mxu0
    %v241 = vadd.f32 0.0, %v240
    %v242 = vpop.f32.mrb[0].mxu0
    %v243 = vadd.f32 0.0, %v242
    %244 = vmatprep.mubr.f32.mxu0 0.0
    %245 = vmatmul.mubr.f32.gmra.mrb[0].mxu0 %v110
    %v246 = vpop.f32.mrb[0].mxu0
    %v247 = vadd.f32 0.0, %v246
    %v248 = vpop.f32.mrb[0].mxu0
    %v249 = vadd.f32 0.0, %v248
    %250 = vmatprep.mubr.f32.mxu0 0.0
    %251 = vmatmul.mubr.f32.gmra.mrb[0].mxu0 %v113
    %v252 = vpop.f32.mrb[0].mxu0
    %v253 = vadd.f32 0.0, %v252
    %v254 = vpop.f32.mrb[0].mxu0
    %v255 = vadd.f32 0.0, %v254
    %256 = vmatprep.mubr.f32.mxu0 0.0
    %257 = vmatmul.mubr.f32.gmra.mrb[0].mxu0 %v116
    %v258 = vpop.f32.mrb[0].mxu0
    %v259 = vadd.f32 0.0, %v258
    %v260 = vpop.f32.mrb[0].mxu0
    %v261 = vadd.f32 0.0, %v260
    %262 = vmatprep.mubr.f32.mxu0 0.0
    %263 = vmatmul.mubr.f32.gmra.mrb[0].mxu0 %v119
    %v264 = vpop.f32.mrb[0].mxu0
    %v265 = vadd.f32 0.0, %v264
    %v266 = vpop.f32.mrb[0].mxu0
    %v267 = vadd.f32 0.0, %v266
    %268 = vmatprep.mubr.f32.mxu0 0.0
    %269 = vmatmul.mubr.f32.gmra.mrb[0].mxu0 %v122
    %v270 = vpop.f32.mrb[0].mxu0
    %v271 = vadd.f32 0.0, %v270
    %v272 = vpop.f32.mrb[0].mxu0
    %v273 = vadd.f32 0.0, %v272
    %274 = vmatprep.mubr.f32.mxu0 0.0
    %275 = vmatmul.mubr.f32.gmra.mrb[0].mxu0 %v125
    %v276 = vpop.f32.mrb[0].mxu0
    %v277 = vadd.f32 0.0, %v276
    %v278 = vpop.f32.mrb[0].mxu0
    %v279 = vadd.f32 0.0, %v278
    %280 = vmatprep.mubr.f32.mxu0 0.0
    %281 = vmatmul.mubr.f32.gmra.mrb[0].mxu0 %v128
    %v282 = vpop.f32.mrb[0].mxu0
    %v283 = vadd.f32 0.0, %v282
    %v284 = vpop.f32.mrb[0].mxu0
    %v285 = vadd.f32 0.0, %v284
    %286 = vmatprep.mubr.f32.mxu0 0.0
    %287 = vmatmul.mubr.f32.gmra.mrb[0].mxu0 %v131
    %v288 = vpop.f32.mrb[0].mxu0
    %v289 = vadd.f32 0.0, %v288
    %v290 = vpop.f32.mrb[0].mxu0
    %v291 = vadd.f32 0.0, %v290
    %292 = vmatprep.mubr.f32.mxu0 0.0
    %293 = vmatmul.mubr.f32.gmra.mrb[0].mxu0 %v134
    %v294 = vpop.f32.mrb[0].mxu0
    %v295 = vadd.f32 0.0, %v294
    %v296 = vpop.f32.mrb[0].mxu0
    %v297 = vadd.f32 0.0, %v296
    %298 = vmatprep.mubr.f32.mxu0 0.0
    %299 = vmatmul.mubr.f32.gmra.mrb[0].mxu0 %v137
    %v300 = vpop.f32.mrb[0].mxu0
    %v301 = vadd.f32 0.0, %v300
    %v302 = vpop.f32.mrb[0].mxu0
    %v303 = vadd.f32 0.0, %v302
    %304 = vdwg.mxu0
    %v306 = vcombine.high %v63, %v63
    %vm307 = vcmask 23552
    %v309 = vsel %vm307, %v47, 0
    %v312 = vsel %vm307, %v48, 0
    %v315 = vsel %vm307, %v49, 0
    %v318 = vsel %vm307, %v50, 0
    %v321 = vsel %vm307, %v51, 0
    %v324 = vsel %vm307, %v52, 0
    %v327 = vsel %vm307, %v53, 0
    %v330 = vsel %vm307, %v54, 0
    %v333 = vsel %vm307, %v55, 0
    %v336 = vsel %vm307, %v56, 0
    %v339 = vsel %vm307, %v57, 0
    %v342 = vsel %vm307, %v58, 0
    %v345 = vsel %vm307, %v59, 0
    %v348 = vsel %vm307, %v60, 0
    %v351 = vsel %vm307, %v61, 0
    %v354 = vsel %vm307, %v62, 0
    %vm356 = vcmask 1042432
    %v357 = vsel %vm356, %v63, 0
    %v359 = vsel %vm356, %v306, 0
    %361 = vmatprep.subr.mxu0 %v359
    %362 = vmatpush1.msra.mxu0 %v357
    %363 = vmatprep.subr.mxu0 0.0
    %364 = vmatpush1.msra.mxu0 0.0
    %365 = vmatprep.subr.mxu0 0.0
    %366 = vmatpush1.msra.mxu0 0.0
    %367 = vmatprep.subr.mxu0 0.0
    %368 = vmatpush1.msra.mxu0 0.0
    %369 = vmatprep.subr.mxu0 0.0
    %370 = vmatpush1.msra.mxu0 0.0
    %371 = vmatprep.subr.mxu0 0.0
    %372 = vmatpush1.msra.mxu0 0.0
    %373 = vmatprep.subr.mxu0 0.0
    %374 = vmatpush1.msra.mxu0 0.0
    %375 = vmatprep.subr.mxu0 0.0
    %376 = vmatpush1.msra.mxu0 0.0
    %377 = vmatprep.subr.mxu0 0.0
    %378 = vmatpush1.msra.mxu0 0.0
    %379 = vmatprep.subr.mxu0 0.0
    %380 = vmatpush1.msra.mxu0 0.0
    %381 = vmatprep.subr.mxu0 0.0
    %382 = vmatpush1.msra.mxu0 0.0
    %383 = vmatprep.subr.mxu0 0.0
    %384 = vmatpush1.msra.mxu0 0.0
    %385 = vmatprep.subr.mxu0 0.0
    %386 = vmatpush1.msra.mxu0 0.0
    %387 = vmatprep.subr.mxu0 0.0
    %388 = vmatpush1.msra.mxu0 0.0
    %389 = vmatprep.subr.mxu0 0.0
    %390 = vmatpush1.msra.mxu0 0.0
    %391 = vmatprep.subr.mxu0 0.0
    %392 = vmatpush1.msra.mxu0 0.0
    %393 = vmatprep.subr.mxu0 0.0
    %394 = vmatpush1.msra.mxu0 0.0
    %395 = vmatprep.subr.mxu0 0.0
    %396 = vmatpush1.msra.mxu0 0.0
    %397 = vmatprep.subr.mxu0 0.0
    %398 = vmatpush1.msra.mxu0 0.0
    %399 = vmatprep.subr.mxu0 0.0
    %400 = vmatpush1.msra.mxu0 0.0
    %401 = vmatprep.subr.mxu0 0.0
    %402 = vmatpush1.msra.mxu0 0.0
    %403 = vmatprep.subr.mxu0 0.0
    %404 = vmatpush1.msra.mxu0 0.0
    %405 = vmatprep.subr.mxu0 0.0
    %406 = vmatpush1.msra.mxu0 0.0
    %407 = vmatprep.subr.mxu0 0.0
    %408 = vmatpush1.msra.mxu0 0.0
    %409 = vmatprep.subr.mxu0 0.0
    %410 = vmatpush1.msra.mxu0 0.0
    %411 = vmatprep.subr.mxu0 0.0
    %412 = vmatpush1.msra.mxu0 0.0
    %413 = vmatprep.subr.mxu0 0.0
    %414 = vmatpush1.msra.mxu0 0.0
    %415 = vmatprep.subr.mxu0 0.0
    %416 = vmatpush1.msra.mxu0 0.0
    %417 = vmatprep.subr.mxu0 0.0
    %418 = vmatpush1.msra.mxu0 0.0
    %419 = vmatprep.subr.mxu0 0.0
    %420 = vmatpush1.msra.mxu0 0.0
    %421 = vmatprep.subr.mxu0 0.0
    %422 = vmatpush1.msra.mxu0 0.0
    %423 = vmatprep.subr.mxu0 0.0
    %424 = vmatpush1.msra.mxu0 0.0
    %425 = vmatprep.mubr.f32.mxu0 0.0
    %426 = vmatmul.mubr.f32.gmra.mrb[0].mxu0 %v309
    %v427 = vpop.f32.mrb[0].mxu0
    %v428 = vadd.f32 %v211, %v427
    %v429 = vpop.f32.mrb[0].mxu0
    %v430 = vadd.f32 %v213, %v429
    %431 = vmatprep.mubr.f32.mxu0 0.0
    %432 = vmatmul.mubr.f32.gmra.mrb[0].mxu0 %v312
    %v433 = vpop.f32.mrb[0].mxu0
    %v434 = vadd.f32 %v217, %v433
    %v435 = vpop.f32.mrb[0].mxu0
    %v436 = vadd.f32 %v219, %v435
    %437 = vmatprep.mubr.f32.mxu0 0.0
    %438 = vmatmul.mubr.f32.gmra.mrb[0].mxu0 %v315
    %v439 = vpop.f32.mrb[0].mxu0
    %v440 = vadd.f32 %v223, %v439
    %v441 = vpop.f32.mrb[0].mxu0
    %v442 = vadd.f32 %v225, %v441
    %443 = vmatprep.mubr.f32.mxu0 0.0
    %444 = vmatmul.mubr.f32.gmra.mrb[0].mxu0 %v318
    %v445 = vpop.f32.mrb[0].mxu0
    %v446 = vadd.f32 %v229, %v445
    %v447 = vpop.f32.mrb[0].mxu0
    %v448 = vadd.f32 %v231, %v447
    %449 = vmatprep.mubr.f32.mxu0 0.0
    %450 = vmatmul.mubr.f32.gmra.mrb[0].mxu0 %v321
    %v451 = vpop.f32.mrb[0].mxu0
    %v452 = vadd.f32 %v235, %v451
    %v453 = vpop.f32.mrb[0].mxu0
    %v454 = vadd.f32 %v237, %v453
    %455 = vmatprep.mubr.f32.mxu0 0.0
    %456 = vmatmul.mubr.f32.gmra.mrb[0].mxu0 %v324
    %v457 = vpop.f32.mrb[0].mxu0
    %v458 = vadd.f32 %v241, %v457
    %v459 = vpop.f32.mrb[0].mxu0
    %v460 = vadd.f32 %v243, %v459
    %461 = vmatprep.mubr.f32.mxu0 0.0
    %462 = vmatmul.mubr.f32.gmra.mrb[0].mxu0 %v327
    %v463 = vpop.f32.mrb[0].mxu0
    %v464 = vadd.f32 %v247, %v463
    %v465 = vpop.f32.mrb[0].mxu0
    %v466 = vadd.f32 %v249, %v465
    %467 = vmatprep.mubr.f32.mxu0 0.0
    %468 = vmatmul.mubr.f32.gmra.mrb[0].mxu0 %v330
    %v469 = vpop.f32.mrb[0].mxu0
    %v470 = vadd.f32 %v253, %v469
    %v471 = vpop.f32.mrb[0].mxu0
    %v472 = vadd.f32 %v255, %v471
    %473 = vmatprep.mubr.f32.mxu0 0.0
    %474 = vmatmul.mubr.f32.gmra.mrb[0].mxu0 %v333
    %v475 = vpop.f32.mrb[0].mxu0
    %v476 = vadd.f32 %v259, %v475
    %v477 = vpop.f32.mrb[0].mxu0
    %v478 = vadd.f32 %v261, %v477
    %479 = vmatprep.mubr.f32.mxu0 0.0
    %480 = vmatmul.mubr.f32.gmra.mrb[0].mxu0 %v336
    %v481 = vpop.f32.mrb[0].mxu0
    %v482 = vadd.f32 %v265, %v481
    %v483 = vpop.f32.mrb[0].mxu0
    %v484 = vadd.f32 %v267, %v483
    %485 = vmatprep.mubr.f32.mxu0 0.0
    %486 = vmatmul.mubr.f32.gmra.mrb[0].mxu0 %v339
    %v487 = vpop.f32.mrb[0].mxu0
    %v488 = vadd.f32 %v271, %v487
    %v489 = vpop.f32.mrb[0].mxu0
    %v490 = vadd.f32 %v273, %v489
    %491 = vmatprep.mubr.f32.mxu0 0.0
    %492 = vmatmul.mubr.f32.gmra.mrb[0].mxu0 %v342
    %v493 = vpop.f32.mrb[0].mxu0
    %v494 = vadd.f32 %v277, %v493
    %v495 = vpop.f32.mrb[0].mxu0
    %v496 = vadd.f32 %v279, %v495
    %497 = vmatprep.mubr.f32.mxu0 0.0
    %498 = vmatmul.mubr.f32.gmra.mrb[0].mxu0 %v345
    %v499 = vpop.f32.mrb[0].mxu0
    %v500 = vadd.f32 %v283, %v499
    %v501 = vpop.f32.mrb[0].mxu0
    %v502 = vadd.f32 %v285, %v501
    %503 = vmatprep.mubr.f32.mxu0 0.0
    %504 = vmatmul.mubr.f32.gmra.mrb[0].mxu0 %v348
    %v505 = vpop.f32.mrb[0].mxu0
    %v506 = vadd.f32 %v289, %v505
    %v507 = vpop.f32.mrb[0].mxu0
    %v508 = vadd.f32 %v291, %v507
    %509 = vmatprep.mubr.f32.mxu0 0.0
    %510 = vmatmul.mubr.f32.gmra.mrb[0].mxu0 %v351
    %v511 = vpop.f32.mrb[0].mxu0
    %v512 = vadd.f32 %v295, %v511
    %v513 = vpop.f32.mrb[0].mxu0
    %v514 = vadd.f32 %v297, %v513
    %515 = vmatprep.mubr.f32.mxu0 0.0
    %516 = vmatmul.mubr.f32.gmra.mrb[0].mxu0 %v354
    %v517 = vpop.f32.mrb[0].mxu0
    %v518 = vadd.f32 %v301, %v517
    %v519 = vpop.f32.mrb[0].mxu0
    %v520 = vadd.f32 %v303, %v519
    %521 = vdwg.mxu0
    %v522 = vld [vmem:[%s4] sm:$0x3]
    %v524 = vlaneseq
    %v525 = vshrl.u32 %v524, 7
    %v526 = vsub.s32 0, %v525
    %v527 = vrot.slane %v522, %v526
    %v528 = vlaneseq
    %v529 = vshrl.u32 %v528, 7
    %v530 = vsub.s32 1, %v529
    %v531 = vrot.slane %v522, %v530
    %v534 = vadd.f32 %v428, %v527
    %v535 = vadd.f32 %v430, %v531
    %v536 = vadd.f32 %v434, %v527
    %v537 = vadd.f32 %v436, %v531
    %v538 = vadd.f32 %v440, %v527
    %v539 = vadd.f32 %v442, %v531
    %v540 = vadd.f32 %v446, %v527
    %v541 = vadd.f32 %v448, %v531
    %v542 = vadd.f32 %v452, %v527
    %v543 = vadd.f32 %v454, %v531
    %v544 = vadd.f32 %v458, %v527
    %v545 = vadd.f32 %v460, %v531
    %v546 = vadd.f32 %v464, %v527
    %v547 = vadd.f32 %v466, %v531
    %v548 = vadd.f32 %v470, %v527
    %v549 = vadd.f32 %v472, %v531
    %v550 = vadd.f32 %v476, %v527
    %v551 = vadd.f32 %v478, %v531
    %v552 = vadd.f32 %v482, %v527
    %v553 = vadd.f32 %v484, %v531
    %v554 = vadd.f32 %v488, %v527
    %v555 = vadd.f32 %v490, %v531
    %v556 = vadd.f32 %v494, %v527
    %v557 = vadd.f32 %v496, %v531
    %v558 = vadd.f32 %v500, %v527
    %v559 = vadd.f32 %v502, %v531
    %v560 = vadd.f32 %v506, %v527
    %v561 = vadd.f32 %v508, %v531
    %v562 = vadd.f32 %v512, %v527
    %v563 = vadd.f32 %v514, %v531
    %v564 = vadd.f32 %v518, %v527
    %v565 = vadd.f32 %v520, %v531
    %v566 = vmax.f32 %v534, 0.0
    %v567 = vmax.f32 %v535, 0.0
    %v568 = vmax.f32 %v536, 0.0
    %v569 = vmax.f32 %v537, 0.0
    %v570 = vmax.f32 %v538, 0.0
    %v571 = vmax.f32 %v539, 0.0
    %v572 = vmax.f32 %v540, 0.0
    %v573 = vmax.f32 %v541, 0.0
    %v574 = vmax.f32 %v542, 0.0
    %v575 = vmax.f32 %v543, 0.0
    %v576 = vmax.f32 %v544, 0.0
    %v577 = vmax.f32 %v545, 0.0
    %v578 = vmax.f32 %v546, 0.0
    %v579 = vmax.f32 %v547, 0.0
    %v580 = vmax.f32 %v548, 0.0
    %v581 = vmax.f32 %v549, 0.0
    %v582 = vmax.f32 %v550, 0.0
    %v583 = vmax.f32 %v551, 0.0
    %v584 = vmax.f32 %v552, 0.0
    %v585 = vmax.f32 %v553, 0.0
    %v586 = vmax.f32 %v554, 0.0
    %v587 = vmax.f32 %v555, 0.0
    %v588 = vmax.f32 %v556, 0.0
    %v589 = vmax.f32 %v557, 0.0
    %v590 = vmax.f32 %v558, 0.0
    %v591 = vmax.f32 %v559, 0.0
    %v592 = vmax.f32 %v560, 0.0
    %v593 = vmax.f32 %v561, 0.0
    %v594 = vmax.f32 %v562, 0.0
    %v595 = vmax.f32 %v563, 0.0
    %v596 = vmax.f32 %v564, 0.0
    %v597 = vmax.f32 %v565, 0.0
    %v598 = vpack.c.bf16 %v568, %v566
    %v599 = vpack.c.bf16 %v569, %v567
    %v600 = vpack.c.bf16 %v572, %v570
    %v601 = vpack.c.bf16 %v573, %v571
    %v602 = vpack.c.bf16 %v576, %v574
    %v603 = vpack.c.bf16 %v577, %v575
    %v604 = vpack.c.bf16 %v580, %v578
    %v605 = vpack.c.bf16 %v581, %v579
    %v606 = vpack.c.bf16 %v584, %v582
    %v607 = vpack.c.bf16 %v585, %v583
    %v608 = vpack.c.bf16 %v588, %v586
    %v609 = vpack.c.bf16 %v589, %v587
    %v610 = vpack.c.bf16 %v592, %v590
    %v611 = vpack.c.bf16 %v593, %v591
    %v612 = vpack.c.bf16 %v596, %v594
    %v613 = vpack.c.bf16 %v597, %v595
    %v614 = vld [vmem:[%s5] sm:$0xff]
    %v615 = vld [vmem:[%s5 + $0x8] sm:$0xff]
    %v616 = vld [vmem:[%s5 + $0x10] sm:$0xff]
    %v617 = vld [vmem:[%s5 + $0x18] sm:$0xff]
    %v618 = vld [vmem:[%s5 + $0x20] sm:$0xff]
    %v619 = vld [vmem:[%s5 + $0x28] sm:$0xff]
    %v620 = vld [vmem:[%s5 + $0x30] sm:$0xff]
    %v621 = vld [vmem:[%s5 + $0x38] sm:$0xff]
    %v622 = vld [vmem:[%s5 + $0x40] sm:$0xff]
    %v623 = vld [vmem:[%s5 + $0x48] sm:$0xff]
    %v624 = vld [vmem:[%s5 + $0x50] sm:$0xff]
    %v625 = vld [vmem:[%s5 + $0x58] sm:$0xff]
    %v626 = vld [vmem:[%s5 + $0x60] sm:$0xff]
    %v627 = vld [vmem:[%s5 + $0x68] sm:$0xff]
    %v628 = vld [vmem:[%s5 + $0x70] sm:$0xff]
    %v629 = vld [vmem:[%s5 + $0x78] sm:$0xff]
    %v630 = vld [vmem:[%s5 + $0x80] sm:$0xff]
    %v631 = vld [vmem:[%s5 + $0x88] sm:$0xff]
    %v632 = vld [vmem:[%s5 + $0x90] sm:$0xff]
    %v633 = vld [vmem:[%s5 + $0x98] sm:$0xff]
    %v634 = vld [vmem:[%s5 + $0xa0] sm:$0xff]
    %v635 = vld [vmem:[%s5 + $0xa8] sm:$0xff]
    %v636 = vld [vmem:[%s5 + $0xb0] sm:$0xff]
    %v637 = vld [vmem:[%s5 + $0xb8] sm:$0xff]
    %v638 = vld [vmem:[%s5 + $0xc0] sm:$0xff]
    %v639 = vld [vmem:[%s5 + $0xc8] sm:$0xff]
    %v640 = vld [vmem:[%s5 + $0xd0] sm:$0xff]
    %v641 = vld [vmem:[%s5 + $0xd8] sm:$0xff]
    %v642 = vld [vmem:[%s5 + $0xe0] sm:$0xff]
    %v643 = vld [vmem:[%s5 + $0xe8] sm:$0xff]
    %v644 = vld [vmem:[%s5 + $0xf0] sm:$0xff]
    %v645 = vld [vmem:[%s5 + $0xf8] sm:$0xff]
    %v646 = vld [vmem:[%s6] sm:$0x3]
    %v648 = vlaneseq
    %v649 = vshrl.u32 %v648, 7
    %v650 = vsub.s32 0, %v649
    %v651 = vrot.slane %v646, %v650
    %v652 = vlaneseq
    %v653 = vshrl.u32 %v652, 7
    %v654 = vsub.s32 1, %v653
    %v655 = vrot.slane %v646, %v654
    %v690 = vunpack.c.l.b16 %v614
    %v691 = vunpack.c.h.b16 %v614
    %v692 = vunpack.c.l.b16 %v615
    %v693 = vunpack.c.h.b16 %v615
    %v694 = vunpack.c.l.b16 %v616
    %v695 = vunpack.c.h.b16 %v616
    %v696 = vunpack.c.l.b16 %v617
    %v697 = vunpack.c.h.b16 %v617
    %v698 = vunpack.c.l.b16 %v618
    %v699 = vunpack.c.h.b16 %v618
    %v700 = vunpack.c.l.b16 %v619
    %v701 = vunpack.c.h.b16 %v619
    %v702 = vunpack.c.l.b16 %v620
    %v703 = vunpack.c.h.b16 %v620
    %v704 = vunpack.c.l.b16 %v621
    %v705 = vunpack.c.h.b16 %v621
    %v706 = vunpack.c.l.b16 %v622
    %v707 = vunpack.c.h.b16 %v622
    %v708 = vunpack.c.l.b16 %v623
    %v709 = vunpack.c.h.b16 %v623
    %v710 = vunpack.c.l.b16 %v624
    %v711 = vunpack.c.h.b16 %v624
    %v712 = vunpack.c.l.b16 %v625
    %v713 = vunpack.c.h.b16 %v625
    %v714 = vunpack.c.l.b16 %v626
    %v715 = vunpack.c.h.b16 %v626
    %v716 = vunpack.c.l.b16 %v627
    %v717 = vunpack.c.h.b16 %v627
    %v718 = vunpack.c.l.b16 %v628
    %v719 = vunpack.c.h.b16 %v628
    %v720 = vunpack.c.l.b16 %v629
    %v721 = vunpack.c.h.b16 %v629
    %v722 = vunpack.c.l.b16 %v630
    %v723 = vunpack.c.h.b16 %v630
    %v724 = vunpack.c.l.b16 %v631
    %v725 = vunpack.c.h.b16 %v631
    %v726 = vunpack.c.l.b16 %v632
    %v727 = vunpack.c.h.b16 %v632
    %v728 = vunpack.c.l.b16 %v633
    %v729 = vunpack.c.h.b16 %v633
    %v730 = vunpack.c.l.b16 %v634
    %v731 = vunpack.c.h.b16 %v634
    %v732 = vunpack.c.l.b16 %v635
    %v733 = vunpack.c.h.b16 %v635
    %v734 = vunpack.c.l.b16 %v636
    %v735 = vunpack.c.h.b16 %v636
    %v736 = vunpack.c.l.b16 %v637
    %v737 = vunpack.c.h.b16 %v637
    %v738 = vunpack.c.l.b16 %v638
    %v739 = vunpack.c.h.b16 %v638
    %v740 = vunpack.c.l.b16 %v639
    %v741 = vunpack.c.h.b16 %v639
    %v742 = vunpack.c.l.b16 %v640
    %v743 = vunpack.c.h.b16 %v640
    %v744 = vunpack.c.l.b16 %v641
    %v745 = vunpack.c.h.b16 %v641
    %v746 = vunpack.c.l.b16 %v642
    %v747 = vunpack.c.h.b16 %v642
    %v748 = vunpack.c.l.b16 %v643
    %v749 = vunpack.c.h.b16 %v643
    %v750 = vunpack.c.l.b16 %v644
    %v751 = vunpack.c.h.b16 %v644
    %v752 = vunpack.c.l.b16 %v645
    %v753 = vunpack.c.h.b16 %v645
    %v754 = vpack.c.b16 %v692, %v690
    %v755 = vpack.c.b16 %v693, %v691
    %v756 = vpack.c.b16 %v696, %v694
    %v757 = vpack.c.b16 %v697, %v695
    %v758 = vpack.c.b16 %v700, %v698
    %v759 = vpack.c.b16 %v701, %v699
    %v760 = vpack.c.b16 %v704, %v702
    %v761 = vpack.c.b16 %v705, %v703
    %v762 = vpack.c.b16 %v708, %v706
    %v763 = vpack.c.b16 %v709, %v707
    %v764 = vpack.c.b16 %v712, %v710
    %v765 = vpack.c.b16 %v713, %v711
    %v766 = vpack.c.b16 %v716, %v714
    %v767 = vpack.c.b16 %v717, %v715
    %v768 = vpack.c.b16 %v720, %v718
    %v769 = vpack.c.b16 %v721, %v719
    %v770 = vpack.c.b16 %v724, %v722
    %v771 = vpack.c.b16 %v725, %v723
    %v772 = vpack.c.b16 %v728, %v726
    %v773 = vpack.c.b16 %v729, %v727
    %v774 = vpack.c.b16 %v732, %v730
    %v775 = vpack.c.b16 %v733, %v731
    %v776 = vpack.c.b16 %v736, %v734
    %v777 = vpack.c.b16 %v737, %v735
    %v778 = vpack.c.b16 %v740, %v738
    %v779 = vpack.c.b16 %v741, %v739
    %v780 = vpack.c.b16 %v744, %v742
    %v781 = vpack.c.b16 %v745, %v743
    %v782 = vpack.c.b16 %v748, %v746
    %v783 = vpack.c.b16 %v749, %v747
    %v784 = vpack.c.b16 %v752, %v750
    %v785 = vpack.c.b16 %v753, %v751
    %818 = vmatprep.subr.bf16.mxu0 %v755
    %819 = vmatpush1.bf16.msra.mxu0 %v754
    %820 = vmatprep.subr.bf16.mxu0 %v757
    %821 = vmatpush1.bf16.msra.mxu0 %v756
    %822 = vmatprep.subr.bf16.mxu0 %v759
    %823 = vmatpush1.bf16.msra.mxu0 %v758
    %824 = vmatprep.subr.bf16.mxu0 %v761
    %825 = vmatpush1.bf16.msra.mxu0 %v760
    %826 = vmatprep.subr.bf16.mxu0 %v763
    %827 = vmatpush1.bf16.msra.mxu0 %v762
    %828 = vmatprep.subr.bf16.mxu0 %v765
    %829 = vmatpush1.bf16.msra.mxu0 %v764
    %830 = vmatprep.subr.bf16.mxu0 %v767
    %831 = vmatpush1.bf16.msra.mxu0 %v766
    %832 = vmatprep.subr.bf16.mxu0 %v769
    %833 = vmatpush1.bf16.msra.mxu0 %v768
    %834 = vmatprep.subr.bf16.mxu0 %v771
    %835 = vmatpush1.bf16.msra.mxu0 %v770
    %836 = vmatprep.subr.bf16.mxu0 %v773
    %837 = vmatpush1.bf16.msra.mxu0 %v772
    %838 = vmatprep.subr.bf16.mxu0 %v775
    %839 = vmatpush1.bf16.msra.mxu0 %v774
    %840 = vmatprep.subr.bf16.mxu0 %v777
    %841 = vmatpush1.bf16.msra.mxu0 %v776
    %842 = vmatprep.subr.bf16.mxu0 %v779
    %843 = vmatpush1.bf16.msra.mxu0 %v778
    %844 = vmatprep.subr.bf16.mxu0 %v781
    %845 = vmatpush1.bf16.msra.mxu0 %v780
    %846 = vmatprep.subr.bf16.mxu0 %v783
    %847 = vmatpush1.bf16.msra.mxu0 %v782
    %848 = vmatprep.subr.bf16.mxu0 %v785
    %849 = vmatpush1.bf16.msra.mxu0 %v784
    %850 = vmatprep.mubr.bf16.mxu0 %v599
    %851 = vmatmul.mubr.bf16.gmra.mrb[0].mxu0 %v598
    %v852 = vpop.f32.mrb[0].mxu0
    %v853 = vadd.f32 %v651, %v852
    %v854 = vpop.f32.mrb[0].mxu0
    %v855 = vadd.f32 %v655, %v854
    %v856 = vpop.f32.mrb[0].mxu0
    %v857 = vadd.f32 %v651, %v856
    %v858 = vpop.f32.mrb[0].mxu0
    %v859 = vadd.f32 %v655, %v858
    %860 = vmatprep.mubr.bf16.mxu0 %v601
    %861 = vmatmul.mubr.bf16.gmra.mrb[0].mxu0 %v600
    %v862 = vpop.f32.mrb[0].mxu0
    %v863 = vadd.f32 %v651, %v862
    %v864 = vpop.f32.mrb[0].mxu0
    %v865 = vadd.f32 %v655, %v864
    %v866 = vpop.f32.mrb[0].mxu0
    %v867 = vadd.f32 %v651, %v866
    %v868 = vpop.f32.mrb[0].mxu0
    %v869 = vadd.f32 %v655, %v868
    %870 = vmatprep.mubr.bf16.mxu0 %v603
    %871 = vmatmul.mubr.bf16.gmra.mrb[0].mxu0 %v602
    %v872 = vpop.f32.mrb[0].mxu0
    %v873 = vadd.f32 %v651, %v872
    %v874 = vpop.f32.mrb[0].mxu0
    %v875 = vadd.f32 %v655, %v874
    %v876 = vpop.f32.mrb[0].mxu0
    %v877 = vadd.f32 %v651, %v876
    %v878 = vpop.f32.mrb[0].mxu0
    %v879 = vadd.f32 %v655, %v878
    %880 = vmatprep.mubr.bf16.mxu0 %v605
    %881 = vmatmul.mubr.bf16.gmra.mrb[0].mxu0 %v604
    %v882 = vpop.f32.mrb[0].mxu0
    %v883 = vadd.f32 %v651, %v882
    %v884 = vpop.f32.mrb[0].mxu0
    %v885 = vadd.f32 %v655, %v884
    %v886 = vpop.f32.mrb[0].mxu0
    %v887 = vadd.f32 %v651, %v886
    %v888 = vpop.f32.mrb[0].mxu0
    %v889 = vadd.f32 %v655, %v888
    %890 = vmatprep.mubr.bf16.mxu0 %v607
    %891 = vmatmul.mubr.bf16.gmra.mrb[0].mxu0 %v606
    %v892 = vpop.f32.mrb[0].mxu0
    %v893 = vadd.f32 %v651, %v892
    %v894 = vpop.f32.mrb[0].mxu0
    %v895 = vadd.f32 %v655, %v894
    %v896 = vpop.f32.mrb[0].mxu0
    %v897 = vadd.f32 %v651, %v896
    %v898 = vpop.f32.mrb[0].mxu0
    %v899 = vadd.f32 %v655, %v898
    %900 = vmatprep.mubr.bf16.mxu0 %v609
    %901 = vmatmul.mubr.bf16.gmra.mrb[0].mxu0 %v608
    %v902 = vpop.f32.mrb[0].mxu0
    %v903 = vadd.f32 %v651, %v902
    %v904 = vpop.f32.mrb[0].mxu0
    %v905 = vadd.f32 %v655, %v904
    %v906 = vpop.f32.mrb[0].mxu0
    %v907 = vadd.f32 %v651, %v906
    %v908 = vpop.f32.mrb[0].mxu0
    %v909 = vadd.f32 %v655, %v908
    %910 = vmatprep.mubr.bf16.mxu0 %v611
    %911 = vmatmul.mubr.bf16.gmra.mrb[0].mxu0 %v610
    %v912 = vpop.f32.mrb[0].mxu0
    %v913 = vadd.f32 %v651, %v912
    %v914 = vpop.f32.mrb[0].mxu0
    %v915 = vadd.f32 %v655, %v914
    %v916 = vpop.f32.mrb[0].mxu0
    %v917 = vadd.f32 %v651, %v916
    %v918 = vpop.f32.mrb[0].mxu0
    %v919 = vadd.f32 %v655, %v918
    %920 = vmatprep.mubr.bf16.mxu0 %v613
    %921 = vmatmul.mubr.bf16.gmra.mrb[0].mxu0 %v612
    %v922 = vpop.f32.mrb[0].mxu0
    %v923 = vadd.f32 %v651, %v922
    %v924 = vpop.f32.mrb[0].mxu0
    %v925 = vadd.f32 %v655, %v924
    %v926 = vpop.f32.mrb[0].mxu0
    %v927 = vadd.f32 %v651, %v926
    %v928 = vpop.f32.mrb[0].mxu0
    %v929 = vadd.f32 %v655, %v928
    %930 = vdwg.mxu0
    %v931 = vmax.f32 %v853, 0.0
    %v932 = vmax.f32 %v855, 0.0
    %v933 = vmax.f32 %v857, 0.0
    %v934 = vmax.f32 %v859, 0.0
    %v935 = vmax.f32 %v863, 0.0
    %v936 = vmax.f32 %v865, 0.0
    %v937 = vmax.f32 %v867, 0.0
    %v938 = vmax.f32 %v869, 0.0
    %v939 = vmax.f32 %v873, 0.0
    %v940 = vmax.f32 %v875, 0.0
    %v941 = vmax.f32 %v877, 0.0
    %v942 = vmax.f32 %v879, 0.0
    %v943 = vmax.f32 %v883, 0.0
    %v944 = vmax.f32 %v885, 0.0
    %v945 = vmax.f32 %v887, 0.0
    %v946 = vmax.f32 %v889, 0.0
    %v947 = vmax.f32 %v893, 0.0
    %v948 = vmax.f32 %v895, 0.0
    %v949 = vmax.f32 %v897, 0.0
    %v950 = vmax.f32 %v899, 0.0
    %v951 = vmax.f32 %v903, 0.0
    %v952 = vmax.f32 %v905, 0.0
    %v953 = vmax.f32 %v907, 0.0
    %v954 = vmax.f32 %v909, 0.0
    %v955 = vmax.f32 %v913, 0.0
    %v956 = vmax.f32 %v915, 0.0
    %v957 = vmax.f32 %v917, 0.0
    %v958 = vmax.f32 %v919, 0.0
    %v959 = vmax.f32 %v923, 0.0
    %v960 = vmax.f32 %v925, 0.0
    %v961 = vmax.f32 %v927, 0.0
    %v962 = vmax.f32 %v929, 0.0
    %v963 = vld [vmem:[#allocation2] sm:$0xff]
    %v964 = vld [vmem:[#allocation2 + $0x8] sm:$0xff]
    %v965 = vld [vmem:[#allocation2 + $0x10] sm:$0xff]
    %v966 = vld [vmem:[#allocation2 + $0x18] sm:$0xff]
    %v967 = vld [vmem:[#allocation2 + $0x20] sm:$0xff]
    %v968 = vld [vmem:[#allocation2 + $0x28] sm:$0xff]
    %v969 = vld [vmem:[#allocation2 + $0x30] sm:$0xff]
    %v970 = vld [vmem:[#allocation2 + $0x38] sm:$0xff]
    %v971 = vld [vmem:[#allocation2 + $0x40] sm:$0xff]
    %v972 = vld [vmem:[#allocation2 + $0x48] sm:$0xff]
    %v973 = vld [vmem:[#allocation2 + $0x50] sm:$0xff]
    %v974 = vld [vmem:[#allocation2 + $0x58] sm:$0xff]
    %v975 = vld [vmem:[#allocation2 + $0x60] sm:$0xff]
    %v976 = vld [vmem:[#allocation2 + $0x68] sm:$0xff]
    %v977 = vld [vmem:[#allocation2 + $0x70] sm:$0xff]
    %v978 = vld [vmem:[#allocation2 + $0x78] sm:$0xff]
    %v979 = vld [vmem:[#allocation2 + $0x80] sm:$0xff]
    %v980 = vld [vmem:[#allocation2 + $0x88] sm:$0xff]
    %v981 = vld [vmem:[#allocation2 + $0x90] sm:$0xff]
    %v982 = vld [vmem:[#allocation2 + $0x98] sm:$0xff]
    %v983 = vld [vmem:[#allocation2 + $0xa0] sm:$0xff]
    %v984 = vld [vmem:[#allocation2 + $0xa8] sm:$0xff]
    %v985 = vld [vmem:[#allocation2 + $0xb0] sm:$0xff]
    %v986 = vld [vmem:[#allocation2 + $0xb8] sm:$0xff]
    %v987 = vld [vmem:[#allocation2 + $0xc0] sm:$0xff]
    %v988 = vld [vmem:[#allocation2 + $0xc8] sm:$0xff]
    %v989 = vld [vmem:[#allocation2 + $0xd0] sm:$0xff]
    %v990 = vld [vmem:[#allocation2 + $0xd8] sm:$0xff]
    %v991 = vld [vmem:[#allocation2 + $0xe0] sm:$0xff]
    %v992 = vld [vmem:[#allocation2 + $0xe8] sm:$0xff]
    %v993 = vld [vmem:[#allocation2 + $0xf0] sm:$0xff]
    %v994 = vld [vmem:[#allocation2 + $0xf8] sm:$0xff]
    %v995 = vld [vmem:[%s8] sm:$0x1]
    %v997 = vlaneseq
    %v998 = vshrl.u32 %v997, 7
    %v999 = vsub.s32 0, %v998
    %v1000 = vrot.slane %v995, %v999
    %1002 = vmatprep.subr.mxu0 0.0
    %1003 = vmatpush1.msra.mxu0 %v963
    %1004 = vmatprep.subr.mxu0 0.0
    %1005 = vmatpush1.msra.mxu0 %v964
    %1006 = vmatprep.subr.mxu0 0.0
    %1007 = vmatpush1.msra.mxu0 %v965
    %1008 = vmatprep.subr.mxu0 0.0
    %1009 = vmatpush1.msra.mxu0 %v966
    %1010 = vmatprep.subr.mxu0 0.0
    %1011 = vmatpush1.msra.mxu0 %v967
    %1012 = vmatprep.subr.mxu0 0.0
    %1013 = vmatpush1.msra.mxu0 %v968
    %1014 = vmatprep.subr.mxu0 0.0
    %1015 = vmatpush1.msra.mxu0 %v969
    %1016 = vmatprep.subr.mxu0 0.0
    %1017 = vmatpush1.msra.mxu0 %v970
    %1018 = vmatprep.subr.mxu0 0.0
    %1019 = vmatpush1.msra.mxu0 %v971
    %1020 = vmatprep.subr.mxu0 0.0
    %1021 = vmatpush1.msra.mxu0 %v972
    %1022 = vmatprep.subr.mxu0 0.0
    %1023 = vmatpush1.msra.mxu0 %v973
    %1024 = vmatprep.subr.mxu0 0.0
    %1025 = vmatpush1.msra.mxu0 %v974
    %1026 = vmatprep.subr.mxu0 0.0
    %1027 = vmatpush1.msra.mxu0 %v975
    %1028 = vmatprep.subr.mxu0 0.0
    %1029 = vmatpush1.msra.mxu0 %v976
    %1030 = vmatprep.subr.mxu0 0.0
    %1031 = vmatpush1.msra.mxu0 %v977
    %1032 = vmatprep.subr.mxu0 0.0
    %1033 = vmatpush1.msra.mxu0 %v978
    %1034 = vmatprep.subr.mxu0 0.0
    %1035 = vmatpush1.msra.mxu0 %v979
    %1036 = vmatprep.subr.mxu0 0.0
    %1037 = vmatpush1.msra.mxu0 %v980
    %1038 = vmatprep.subr.mxu0 0.0
    %1039 = vmatpush1.msra.mxu0 %v981
    %1040 = vmatprep.subr.mxu0 0.0
    %1041 = vmatpush1.msra.mxu0 %v982
    %1042 = vmatprep.subr.mxu0 0.0
    %1043 = vmatpush1.msra.mxu0 %v983
    %1044 = vmatprep.subr.mxu0 0.0
    %1045 = vmatpush1.msra.mxu0 %v984
    %1046 = vmatprep.subr.mxu0 0.0
    %1047 = vmatpush1.msra.mxu0 %v985
    %1048 = vmatprep.subr.mxu0 0.0
    %1049 = vmatpush1.msra.mxu0 %v986
    %1050 = vmatprep.subr.mxu0 0.0
    %1051 = vmatpush1.msra.mxu0 %v987
    %1052 = vmatprep.subr.mxu0 0.0
    %1053 = vmatpush1.msra.mxu0 %v988
    %1054 = vmatprep.subr.mxu0 0.0
    %1055 = vmatpush1.msra.mxu0 %v989
    %1056 = vmatprep.subr.mxu0 0.0
    %1057 = vmatpush1.msra.mxu0 %v990
    %1058 = vmatprep.subr.mxu0 0.0
    %1059 = vmatpush1.msra.mxu0 %v991
    %1060 = vmatprep.subr.mxu0 0.0
    %1061 = vmatpush1.msra.mxu0 %v992
    %1062 = vmatprep.subr.mxu0 0.0
    %1063 = vmatpush1.msra.mxu0 %v993
    %1064 = vmatprep.subr.mxu0 0.0
    %1065 = vmatpush1.msra.mxu0 %v994
    %1066 = vmatprep.mubr.f32.mxu0 %v932
    %1067 = vmatmul.mubr.f32.gmra.mrb[0].mxu0 %v931
    %v1068 = vpop.f32.mrb[0].mxu0
    %v1069 = vadd.f32 %v1000, %v1068
    %v1070 = vpop.f32.mrb[0].mxu0
    %1071 = vmatprep.mubr.f32.mxu0 %v934
    %1072 = vmatmul.mubr.f32.gmra.mrb[0].mxu0 %v933
    %v1073 = vpop.f32.mrb[0].mxu0
    %v1074 = vadd.f32 %v1000, %v1073
    %v1075 = vpop.f32.mrb[0].mxu0
    %1076 = vmatprep.mubr.f32.mxu0 %v936
    %1077 = vmatmul.mubr.f32.gmra.mrb[0].mxu0 %v935
    %v1078 = vpop.f32.mrb[0].mxu0
    %v1079 = vadd.f32 %v1000, %v1078
    %v1080 = vpop.f32.mrb[0].mxu0
    %1081 = vmatprep.mubr.f32.mxu0 %v938
    %1082 = vmatmul.mubr.f32.gmra.mrb[0].mxu0 %v937
    %v1083 = vpop.f32.mrb[0].mxu0
    %v1084 = vadd.f32 %v1000, %v1083
    %v1085 = vpop.f32.mrb[0].mxu0
    %1086 = vmatprep.mubr.f32.mxu0 %v940
    %1087 = vmatmul.mubr.f32.gmra.mrb[0].mxu0 %v939
    %v1088 = vpop.f32.mrb[0].mxu0
    %v1089 = vadd.f32 %v1000, %v1088
    %v1090 = vpop.f32.mrb[0].mxu0
    %1091 = vmatprep.mubr.f32.mxu0 %v942
    %1092 = vmatmul.mubr.f32.gmra.mrb[0].mxu0 %v941
    %v1093 = vpop.f32.mrb[0].mxu0
    %v1094 = vadd.f32 %v1000, %v1093
    %v1095 = vpop.f32.mrb[0].mxu0
    %1096 = vmatprep.mubr.f32.mxu0 %v944
    %1097 = vmatmul.mubr.f32.gmra.mrb[0].mxu0 %v943
    %v1098 = vpop.f32.mrb[0].mxu0
    %v1099 = vadd.f32 %v1000, %v1098
    %v1100 = vpop.f32.mrb[0].mxu0
    %1101 = vmatprep.mubr.f32.mxu0 %v946
    %1102 = vmatmul.mubr.f32.gmra.mrb[0].mxu0 %v945
    %v1103 = vpop.f32.mrb[0].mxu0
    %v1104 = vadd.f32 %v1000, %v1103
    %v1105 = vpop.f32.mrb[0].mxu0
    %1106 = vmatprep.mubr.f32.mxu0 %v948
    %1107 = vmatmul.mubr.f32.gmra.mrb[0].mxu0 %v947
    %v1108 = vpop.f32.mrb[0].mxu0
    %v1109 = vadd.f32 %v1000, %v1108
    %v1110 = vpop.f32.mrb[0].mxu0
    %1111 = vmatprep.mubr.f32.mxu0 %v950
    %1112 = vmatmul.mubr.f32.gmra.mrb[0].mxu0 %v949
    %v1113 = vpop.f32.mrb[0].mxu0
    %v1114 = vadd.f32 %v1000, %v1113
    %v1115 = vpop.f32.mrb[0].mxu0
    %1116 = vmatprep.mubr.f32.mxu0 %v952
    %1117 = vmatmul.mubr.f32.gmra.mrb[0].mxu0 %v951
    %v1118 = vpop.f32.mrb[0].mxu0
    %v1119 = vadd.f32 %v1000, %v1118
    %v1120 = vpop.f32.mrb[0].mxu0
    %1121 = vmatprep.mubr.f32.mxu0 %v954
    %1122 = vmatmul.mubr.f32.gmra.mrb[0].mxu0 %v953
    %v1123 = vpop.f32.mrb[0].mxu0
    %v1124 = vadd.f32 %v1000, %v1123
    %v1125 = vpop.f32.mrb[0].mxu0
    %1126 = vmatprep.mubr.f32.mxu0 %v956
    %1127 = vmatmul.mubr.f32.gmra.mrb[0].mxu0 %v955
    %v1128 = vpop.f32.mrb[0].mxu0
    %v1129 = vadd.f32 %v1000, %v1128
    %v1130 = vpop.f32.mrb[0].mxu0
    %1131 = vmatprep.mubr.f32.mxu0 %v958
    %1132 = vmatmul.mubr.f32.gmra.mrb[0].mxu0 %v957
    %v1133 = vpop.f32.mrb[0].mxu0
    %v1134 = vadd.f32 %v1000, %v1133
    %v1135 = vpop.f32.mrb[0].mxu0
    %1136 = vmatprep.mubr.f32.mxu0 %v960
    %1137 = vmatmul.mubr.f32.gmra.mrb[0].mxu0 %v959
    %v1138 = vpop.f32.mrb[0].mxu0
    %v1139 = vadd.f32 %v1000, %v1138
    %v1140 = vpop.f32.mrb[0].mxu0
    %1141 = vmatprep.mubr.f32.mxu0 %v962
    %1142 = vmatmul.mubr.f32.gmra.mrb[0].mxu0 %v961
    %v1143 = vpop.f32.mrb[0].mxu0
    %v1144 = vadd.f32 %v1000, %v1143
    %v1145 = vpop.f32.mrb[0].mxu0
    %1146 = vdwg.mxu0
    %1147 = vst [vmem:[#allocation5] sm:$0xff] %v1069
    %1148 = vst [vmem:[#allocation5 + $0x8] sm:$0xff] %v1074
    %1149 = vst [vmem:[#allocation5 + $0x10] sm:$0xff] %v1079
    %1150 = vst [vmem:[#allocation5 + $0x18] sm:$0xff] %v1084
    %1151 = vst [vmem:[#allocation5 + $0x20] sm:$0xff] %v1089
    %1152 = vst [vmem:[#allocation5 + $0x28] sm:$0xff] %v1094
    %1153 = vst [vmem:[#allocation5 + $0x30] sm:$0xff] %v1099
    %1154 = vst [vmem:[#allocation5 + $0x38] sm:$0xff] %v1104
    %1155 = vst [vmem:[#allocation5 + $0x40] sm:$0xff] %v1109
    %1156 = vst [vmem:[#allocation5 + $0x48] sm:$0xff] %v1114
    %1157 = vst [vmem:[#allocation5 + $0x50] sm:$0xff] %v1119
    %1158 = vst [vmem:[#allocation5 + $0x58] sm:$0xff] %v1124
    %1159 = vst [vmem:[#allocation5 + $0x60] sm:$0xff] %v1129
    %1160 = vst [vmem:[#allocation5 + $0x68] sm:$0xff] %v1134
    %1161 = vst [vmem:[#allocation5 + $0x70] sm:$0xff] %v1139
    %1162 = vst [vmem:[#allocation5 + $0x78] sm:$0xff] %v1144
    // Predicated region
    $region42: #{tpu_custom_call.1} parent=1 // pred_check
      _
    $region43: #{tpu_custom_call.1} parent=1 // pred_check_branch
      %1164 = sbr.rel (0) target = $region45
    $region44: #{tpu_custom_call.1} parent=1 // pred_region
      %s1166 = ssub.s32 2048, 2048
      %1167 = vsyncadd [#allocation4], %s1166
      %s1168 = sshll.u32 [#allocation5], 4
      %s1169 = int_to_ptr.vmem [resolvable:$true] %s1168
      %1174 = dma.vmem_to_hbm [thread:$0]  %s1169, 2048, %s9, [#allocation4], 128, 128, 8
    $region45: #{tpu_custom_call.1} parent=1 // pred_fallthru
      _
    // Predicated region
    $region46: #{tpu_custom_call.1} parent=1 // pred_check
      _
    $region47: #{tpu_custom_call.1} parent=1 // pred_check_branch
      %1176 = sbr.rel (0) target = $region49
    $region48: #{tpu_custom_call.1} parent=1 // pred_region
      %1177 = dma.done [#allocation4], 2048
    $region49: #{tpu_custom_call.1} parent=1 // pred_fallthru
      _
    %1178 = vsyncpa [#allocation3], 1
    %1179 = vsyncpa [#allocation4], 1

</llo_original>
